<compile_context>
chip_gen: v5e
topology: v5e:2x2
jax: 0.10.0
libtpu: 0.0.40
codegen_flags: <defaults>
</compile_context>

<pallas_src>
import math
import functools

import jax
import jax.numpy as jnp
from jax import lax
from jax.experimental import pallas as pl
from jax.experimental.pallas import tpu as pltpu


_GOLDEN = 0x9E3779B9


def _hash_u32(x):
    """Trimmed lowbias32-style mixer; all arithmetic wraps in uint32."""
    x = x ^ (x >> 16)
    x = x * jnp.uint32(0x7FEB352D)
    x = x ^ (x >> 15)
    return x


def _posenc_dropout_kernel(seed_ref, x_ref, pos_ref, o_ref, *,
                           dropout_rate, train):
    x = x_ref[...]
    pos = pos_ref[...]
    if x_ref.ndim == 3:
        # x: (tile_l, B, D), pos: (tile_l, D) -> broadcast over batch (sublane)
        y = x + pos[:, None, :]
    else:
        # x: (tile_l, N), pos: (tile_l, N)  (pos pre-tiled on host)
        y = x + pos

    if train and dropout_rate > 0.0:
        shape = x_ref.shape
        tile_l = shape[0]
        inner = int(math.prod(shape[1:]))

        # Within-block flat index (int32; a block is always << 2^31 elements).
        if x_ref.ndim == 3:
            _, b, d = shape
            idx = (lax.broadcasted_iota(jnp.int32, shape, 0) * (b * d)
                   + lax.broadcasted_iota(jnp.int32, shape, 1) * d
                   + lax.broadcasted_iota(jnp.int32, shape, 2))
        else:
            _, n = shape
            idx = (lax.broadcasted_iota(jnp.int32, shape, 0) * n
                   + lax.broadcasted_iota(jnp.int32, shape, 1))

        # Fold the block offset and the seed into ONE uint32 scalar (wraps for
        # > 2^32 global elements; benign for a dropout stream).
        seed_u = seed_ref[0].astype(jnp.uint32)
        l0_u = (pl.program_id(0) * tile_l).astype(jnp.uint32)
        off = l0_u * jnp.uint32(inner) + seed_u * jnp.uint32(_GOLDEN)

        bits = _hash_u32(idx.astype(jnp.uint32) + off)

        # Keep with prob (1 - p): raw-bits uint32 compare against round(p*2^32)
        # (dropout probability quantized to 2^-32 -- negligible).
        thr = jnp.uint32(min(int(round(dropout_rate * 4294967296.0)),
                             4294967295))
        keep = bits >= thr

        scale = jnp.asarray(1.0 / (1.0 - dropout_rate), dtype=y.dtype)
        y = jnp.where(keep, y * scale, jnp.zeros_like(y))

    o_ref[...] = y.astype(o_ref.dtype)


def make_pos_embedding(embed_dim: int, max_length: int = 1000) -> jnp.ndarray:
    """Deterministic sin/cos table identical to the PyTorch __init__."""
    den = jnp.exp(-jnp.arange(0, embed_dim, 2, dtype=jnp.float32)
                  * (math.log(10000.0) / embed_dim))               # (D/2,)
    pos = jnp.arange(0, max_length, dtype=jnp.float32)[:, None]    # (L_max, 1)
    pe = jnp.zeros((max_length, embed_dim), dtype=jnp.float32)
    pe = pe.at[:, 0::2].set(jnp.sin(pos * den))
    pe = pe.at[:, 1::2].set(jnp.cos(pos * den))
    return pe[:, None, :]                                           # (L_max, 1, D)


def _choose_tile_l(L, row_bytes, target_bytes=4 << 20, min_steps=4):
    """Rows per block: ~4 MiB blocks (amortize the ~0.35 us/step overhead),
    tile_l a multiple of 8 (sublane aligned) or the full L, and capped so a
    large L still gets >= `min_steps` grid steps for pipelining / megacore."""
    if L <= 8 or L * row_bytes <= target_bytes:
        return int(L)                               # single full-extent block
    rows = max(8, (int(target_bytes // max(1, row_bytes)) // 8) * 8)
    cap = max(8, ((pl.cdiv(L, min_steps) + 7) // 8) * 8)
    return int(min(rows, cap))


def positional_encoding_fwd(x, pos_embedding, *, dropout_rate, seed,
                            train=True, tile_l=None):
    """x: (L, B, D).  pos_embedding: (max_len, 1, D) or (max_len, D)."""
    L, B, D = x.shape
    assert 0.0 <= dropout_rate < 1.0

    pos2d = pos_embedding[:, 0, :] if pos_embedding.ndim == 3 else pos_embedding
    assert pos2d.shape[0] >= L and pos2d.shape[1] == D
    pos2d = pos2d[:L].astype(x.dtype)          # slice + cast ONCE in the wrapper

    itemsize = jnp.dtype(x.dtype).itemsize

    # Lane-dense path: when B or D would underfill sublanes/lanes, flatten to
    # (L, B*D) and tile the pos table on the host so stores are unmasked.
    flatten = (B < 8) or (D % 128 != 0)

    kernel = functools.partial(_posenc_dropout_kernel,
                               dropout_rate=float(dropout_rate),
                               train=bool(train))
    seed_arr = jnp.asarray([seed], dtype=jnp.int32)

    if flatten:
        N = B * D
        x_in = x.reshape(L, N)                                   # free (row-major)
        pos_in = jnp.broadcast_to(pos2d[:, None, :], (L, B, D)).reshape(L, N)
        row_bytes = N * itemsize
        pos_row_bytes = row_bytes
        if tile_l is None:
            tile_l = _choose_tile_l(L, row_bytes)
        in_specs = [pl.BlockSpec((tile_l, N), lambda i, s: (i, 0)),
                    pl.BlockSpec((tile_l, N), lambda i, s: (i, 0))]
        out_spec = pl.BlockSpec((tile_l, N), lambda i, s: (i, 0))
        out_shape = jax.ShapeDtypeStruct((L, N), x.dtype)
        bytes_accessed = 3 * L * N * itemsize
    else:
        x_in = x
        pos_in = pos2d                                           # dense (L, D)
        row_bytes = B * D * itemsize
        pos_row_bytes = D * itemsize
        if tile_l is None:
            tile_l = _choose_tile_l(L, row_bytes)
        in_specs = [pl.BlockSpec((tile_l, B, D), lambda i, s: (i, 0, 0)),
                    pl.BlockSpec((tile_l, D), lambda i, s: (i, 0))]
        out_spec = pl.BlockSpec((tile_l, B, D), lambda i, s: (i, 0, 0))
        out_shape = jax.ShapeDtypeStruct((L, B, D), x.dtype)
        bytes_accessed = 2 * L * B * D * itemsize + L * D * itemsize

    grid = (pl.cdiv(L, tile_l),)                 # ragged last block is OK

    # Double-buffered working set: 2x (x block + out block) + 2x pos block.
    x_block = tile_l * row_bytes
    pos_block = tile_l * pos_row_bytes
    vmem_need = 4 * x_block + 2 * pos_block + (2 << 20)
    vmem_limit = int(min(max(vmem_need, 16 << 20), 32 << 20))   # safe on v5e/v6e/v7x

    cost = pl.CostEstimate(flops=L * B * D, transcendentals=0,
                           bytes_accessed=int(bytes_accessed))

    grid_spec = pltpu.PrefetchScalarGridSpec(
        num_scalar_prefetch=1,
        grid=grid,
        in_specs=in_specs,
        out_specs=out_spec,
    )

    out = pl.pallas_call(
        kernel,
        out_shape=out_shape,
        grid_spec=grid_spec,
        cost_estimate=cost,
        compiler_params=pltpu.CompilerParams(
            # Stateless per-element RNG -> grid steps fully independent, so
            # "parallel" lets v7x shard the grid across its 2 TensorCores.
            dimension_semantics=("parallel",),
            vmem_limit_bytes=vmem_limit),
    )(seed_arr, x_in, pos_in)

    return out.reshape(L, B, D)


if __name__ == "__main__":
    DROPOUT = 0.1
    key = jax.random.PRNGKey(0)

    def check(L, B, D, max_len):
        kx = jax.random.fold_in(key, L * 1000 + B * 10 + D)
        x = jax.random.normal(kx, (L, B, D), dtype=jnp.float32)
        pos_emb = make_pos_embedding(D, max_len)          # (max_len, 1, D)

        out_train = jax.block_until_ready(
            positional_encoding_fwd(x, pos_emb, dropout_rate=DROPOUT,
                                    seed=0, train=True))
        out_eval = jax.block_until_ready(
            positional_encoding_fwd(x, pos_emb, dropout_rate=DROPOUT,
                                    seed=0, train=False))

        ref = x + pos_emb[:L].astype(x.dtype)
        assert out_train.shape == (L, B, D)
        assert out_eval.shape == (L, B, D)
        assert jnp.allclose(out_eval, ref, atol=1e-6)

        # Every training-mode element is either 0 or (x+pos)/(1-p).
        scaled = ref / (1.0 - DROPOUT)
        ok = (jnp.isclose(out_train, 0.0, atol=1e-6)
              | jnp.isclose(out_train, scaled, rtol=1e-5, atol=1e-5))
        assert bool(jnp.all(ok))

    # Module-spec small shape (L, B, D): exercises the lane-dense flattened path.
    check(L=8, B=2, D=32, max_len=64)
    # B >= 8, D % 128 == 0: exercises the 3D path with a dense (L, D) pos spec.
    check(L=16, B=8, D=128, max_len=32)

    print("KERNEL_OK")
</pallas_src>

<mosaic_0001>
module attributes {stable_mosaic.version = 11 : i64} {
  func.func @_posenc_dropout_kernel(%arg0: i32, %arg1: memref<1xi32, #tpu.memory_space<smem>>, %arg2: memref<8x64xf32, #tpu.memory_space<vmem>>, %arg3: memref<8x64xf32, #tpu.memory_space<vmem>>, %arg4: memref<8x64xf32, #tpu.memory_space<vmem>>) attributes {dimension_semantics = [#tpu.dimension_semantics<parallel>], iteration_bounds = array<i64: 1>, scalar_prefetch = 1 : i64, scratch_operands = 0 : i64, tpu.core_type = #tpu.core_type<tc>, window_params = [{transform_indices = @transform_0, window_bounds = array<i64: 8, 64>}, {transform_indices = @transform_1, window_bounds = array<i64: 8, 64>}, {transform_indices = @transform_2, window_bounds = array<i64: 8, 64>}]} {
    %c0 = arith.constant 0 : index
    %c0_0 = arith.constant 0 : index
    %0 = vector.load %arg2[%c0, %c0_0] : memref<8x64xf32, #tpu.memory_space<vmem>>, vector<8x64xf32>
    %c0_1 = arith.constant 0 : index
    %c0_2 = arith.constant 0 : index
    %1 = vector.load %arg3[%c0_1, %c0_2] : memref<8x64xf32, #tpu.memory_space<vmem>>, vector<8x64xf32>
    %2 = arith.addf %0, %1 : vector<8x64xf32>
    %3 = tpu.iota {dimensions = array<i32: 0>} : vector<8x64xi32>
    %c64_i32 = arith.constant 64 : i32
    %4 = vector.broadcast %c64_i32 : i32 to vector<8x64xi32>
    %5 = arith.muli %3, %4 : vector<8x64xi32>
    %6 = tpu.iota {dimensions = array<i32: 1>} : vector<8x64xi32>
    %7 = arith.addi %5, %6 : vector<8x64xi32>
    %c0_3 = arith.constant 0 : index
    %8 = memref.load %arg1[%c0_3] : memref<1xi32, #tpu.memory_space<smem>>
    %c8_i32 = arith.constant 8 : i32
    %9 = arith.muli %arg0, %c8_i32 : i32
    %c64_i32_4 = arith.constant 64 : i32
    %10 = arith.muli %9, %c64_i32_4 : i32
    %c-1640531527_i32 = arith.constant -1640531527 : i32
    %11 = arith.muli %8, %c-1640531527_i32 : i32
    %12 = arith.addi %10, %11 : i32
    %13 = vector.broadcast %12 : i32 to vector<8x64xi32>
    %14 = arith.addi %7, %13 : vector<8x64xi32>
    %c16_i32 = arith.constant 16 : i32
    %15 = vector.broadcast %c16_i32 : i32 to vector<8x64xi32>
    %16 = arith.shrui %14, %15 : vector<8x64xi32>
    %17 = arith.xori %14, %16 : vector<8x64xi32>
    %c2146121005_i32 = arith.constant 2146121005 : i32
    %18 = vector.broadcast %c2146121005_i32 : i32 to vector<8x64xi32>
    %19 = arith.muli %17, %18 : vector<8x64xi32>
    %c15_i32 = arith.constant 15 : i32
    %20 = vector.broadcast %c15_i32 : i32 to vector<8x64xi32>
    %21 = arith.shrui %19, %20 : vector<8x64xi32>
    %22 = arith.xori %19, %21 : vector<8x64xi32>
    %c429496730_i32 = arith.constant 429496730 : i32
    %23 = vector.broadcast %c429496730_i32 : i32 to vector<8x64xi32>
    %24 = arith.cmpi uge, %22, %23 : vector<8x64xi32>
    %cst = arith.constant 1.11111116 : f32
    %25 = vector.broadcast %cst : f32 to vector<8x64xf32>
    %26 = arith.mulf %2, %25 : vector<8x64xf32>
    %cst_5 = arith.constant 0.000000e+00 : f32
    %27 = vector.broadcast %cst_5 : f32 to vector<8x64xf32>
    %28 = arith.select %24, %26, %27 : vector<8x64xi1>, vector<8x64xf32>
    %c0_6 = arith.constant 0 : index
    %c0_7 = arith.constant 0 : index
    %29 = vector.load %arg4[%c0_6, %c0_7] : memref<8x64xf32, #tpu.memory_space<vmem>>, vector<8x64xf32>
    tpu.vector_store %arg4[%c0_6, %c0_7], %28 {strides = array<i32>} : memref<8x64xf32, #tpu.memory_space<vmem>>, vector<8x64xf32>,
    return
  }
  func.func @transform_0(%arg0: i32, %arg1: memref<1xi32, #tpu.memory_space<smem>>) -> (i32, i32) {
    %c0_i32 = arith.constant 0 : i32
    %c0_i32_0 = arith.constant 0 : i32
    return %arg0, %c0_i32 : i32, i32
  }
  func.func @transform_1(%arg0: i32, %arg1: memref<1xi32, #tpu.memory_space<smem>>) -> (i32, i32) {
    %c0_i32 = arith.constant 0 : i32
    %c0_i32_0 = arith.constant 0 : i32
    return %arg0, %c0_i32 : i32, i32
  }
  func.func @transform_2(%arg0: i32, %arg1: memref<1xi32, #tpu.memory_space<smem>>) -> (i32, i32) {
    %c0_i32 = arith.constant 0 : i32
    %c0_i32_0 = arith.constant 0 : i32
    return %arg0, %c0_i32 : i32, i32
  }
}

</mosaic_0001>

<llo_original>
// kernel: tpu_custom_call.1
$region0: #{tpu_custom_call.1}
  #allocation0 [shape = 'u32[]', space=smem, size = 0x4, offset = 0x4, fixed_abs, tag = 'smem constant byte address 0x4 - core index']
  #allocation1 [shape = 'u32[72,128]{1,0:T(1,128)}', space=vmem, size = 0x9000, scoped, tag = 'internal scratch']
  #allocation2 [shape = 's32[1]{0}', space=sflag, size = 0x4, scoped, tag = 'scoped memory for tpu_custom_call.1']
  #allocation3 [shape = 's32[1]{0:T(128)S(6)}', space=smem, size = 0x200, scoped, tag = 'prefetched SMEM operand 0']
  %s0 = inlined_call_operand.<no memory space> [shape: s32[1], index: 0, kind: input, shape index: {}]
  %s1 = inlined_call_operand.hbm [shape: f32[8,64], index: 1, kind: input, shape index: {}]
  %s2 = inlined_call_operand.hbm [shape: f32[8,64], index: 2, kind: input, shape index: {}]
  %s3 = inlined_call_operand.hbm [shape: f32[8,64], index: 3, kind: output, shape index: {}]
  %s4 = sld [smem:[#allocation0]]
  $region26: #{tpu_custom_call.1} parent=0
    _
  %s6 = ssub.s32 1, %s4
  %s7 = scalar_select 0, %s6, %s4
  %8 = sst [smem:[#allocation3]] %s0
  $region1: #{tpu_custom_call.1} parent=0
    #allocation4 [shape = 'u8[4096]{0}', space=vmem, size = 0x1000, scoped, tag = 'input window, operand 1, single buffered']
    #allocation5 [shape = 's32[1]{0}', space=sflag, size = 0x4, scoped, tag = 'scoped memory for tpu_custom_call.1']
    #allocation6 [shape = 's32[1]{0}', space=sflag, size = 0x4, scoped, tag = 'scoped memory for tpu_custom_call.1']
    #allocation7 [shape = 'u8[4096]{0}', space=vmem, size = 0x1000, scoped, tag = 'input window, operand 2, single buffered']
    #allocation8 [shape = 's32[1]{0}', space=sflag, size = 0x4, scoped, tag = 'scoped memory for tpu_custom_call.1']
    #allocation9 [shape = 'u8[4096]{0}', space=vmem, size = 0x1000, scoped, tag = 'output window, operand 0, single buffered']
    %9 = vsyncpa [#allocation5], 0
    %10 = vsyncpa [#allocation8], 0
    %11 = vsyncpa [#allocation6], 0
    // Predicated region
    $region2: #{tpu_custom_call.1} parent=1 // pred_check
      _
    $region3: #{tpu_custom_call.1} parent=1 // pred_check_branch
      %13 = sbr.rel (0) target = $region5
    $region4: #{tpu_custom_call.1} parent=1 // pred_region
      %15 = vsyncadd [#allocation5], 0
      %s17 = sshll.u32 %s1, 4
      %s18 = int_to_ptr.hbm [resolvable:$true] %s17
      %s19 = sshll.u32 [#allocation4], 4
      %s20 = int_to_ptr.vmem [resolvable:$true] %s19
      %22 = dma.hbm_to_vmem [thread:$0]  %s18, 128, %s20, [#allocation5]
    $region5: #{tpu_custom_call.1} parent=1 // pred_fallthru
      _
    // Predicated region
    $region6: #{tpu_custom_call.1} parent=1 // pred_check
      _
    $region7: #{tpu_custom_call.1} parent=1 // pred_check_branch
      %24 = sbr.rel (0) target = $region9
    $region8: #{tpu_custom_call.1} parent=1 // pred_region
      %26 = vsyncadd [#allocation8], 0
      %s28 = sshll.u32 %s2, 4
      %s29 = int_to_ptr.hbm [resolvable:$true] %s28
      %s30 = sshll.u32 [#allocation7], 4
      %s31 = int_to_ptr.vmem [resolvable:$true] %s30
      %33 = dma.hbm_to_vmem [thread:$0]  %s29, 128, %s31, [#allocation8]
    $region9: #{tpu_custom_call.1} parent=1 // pred_fallthru
      _
    // Predicated region
    $region10: #{tpu_custom_call.1} parent=1 // pred_check
      _
    $region11: #{tpu_custom_call.1} parent=1 // pred_check_branch
      %35 = sbr.rel (0) target = $region13
    $region12: #{tpu_custom_call.1} parent=1 // pred_region
      %37 = dma.done [#allocation5], 128
    $region13: #{tpu_custom_call.1} parent=1 // pred_fallthru
      _
    // Predicated region
    $region14: #{tpu_custom_call.1} parent=1 // pred_check
      _
    $region15: #{tpu_custom_call.1} parent=1 // pred_check_branch
      %39 = sbr.rel (0) target = $region17
    $region16: #{tpu_custom_call.1} parent=1 // pred_region
      %41 = dma.done [#allocation8], 128
    $region17: #{tpu_custom_call.1} parent=1 // pred_fallthru
      _
    %v42 = vld [vmem:[#allocation4] sm:$0xff]
    %v43 = vld [vmem:[#allocation7] sm:$0xff]
    %v44 = vadd.f32 %v42, %v43
    %v45 = vlaneseq
    %v46 = vshrl.u32 %v45, 7
    %v47 = vmul.u32 %v46, 64
    %v48 = vlaneseq
    %v49 = vand.u32 %v48, 127
    %v50 = vadd.s32 %v47, %v49
    %s51 = sld [smem:[#allocation3]]
    %s52 = smul.u32 0, 512
    %s53 = smul.u32 %s51, 2654435769
    %s54 = sadd.s32 %s52, %s53
    %v55 = vstv %s54
    %v56 = vadd.s32 %v50, %v55
    %v57 = vshrl.u32 %v56, 16
    %v58 = vxor.u32 %v56, %v57
    %v59 = vmul.u32 %v58, 2146121005
    %v60 = vshrl.u32 %v59, 15
    %v61 = vxor.u32 %v59, %v60
    %v62 = vadd.s32 %v61, 2147483648
    %vm64 = vcmp.ge.s32.totalorder %v62, 2576980378
    %v65 = vmul.f32 %v44, 1.1111112
    %v66 = vsel %vm64, %v65, 0.0
    %vm67 = vcmask 523264
    %68 = vst.msk [vmem:[#allocation9] sm:$0xff] %vm67, %v66
    // Predicated region
    $region18: #{tpu_custom_call.1} parent=1 // pred_check
      _
    $region19: #{tpu_custom_call.1} parent=1 // pred_check_branch
      %70 = sbr.rel (0) target = $region21
    $region20: #{tpu_custom_call.1} parent=1 // pred_region
      %72 = vsyncadd [#allocation6], 0
      %s74 = sshll.u32 [#allocation9], 4
      %s75 = int_to_ptr.vmem [resolvable:$true] %s74
      %s76 = sshll.u32 %s3, 4
      %s77 = int_to_ptr.hbm [resolvable:$true] %s76
      %79 = dma.vmem_to_hbm [thread:$0]  %s75, 128, %s77, [#allocation6]
    $region21: #{tpu_custom_call.1} parent=1 // pred_fallthru
      _
    // Predicated region
    $region22: #{tpu_custom_call.1} parent=1 // pred_check
      _
    $region23: #{tpu_custom_call.1} parent=1 // pred_check_branch
      %81 = sbr.rel (0) target = $region25
    $region24: #{tpu_custom_call.1} parent=1 // pred_region
      %83 = dma.done [#allocation6], 128
    $region25: #{tpu_custom_call.1} parent=1 // pred_fallthru
      _
    %84 = vsyncpa [#allocation5], 1
    %85 = vsyncpa [#allocation8], 1
    %86 = vsyncpa [#allocation6], 1

</llo_original>
